<compile_context>
chip_gen: v7x
topology: tpu7x:2x2x1
jax: 0.10.0
libtpu: 0.0.40
codegen_flags: <defaults>
</compile_context>

<pallas_src>
import functools

import jax
import jax.numpy as jnp
from jax.experimental import pallas as pl
from jax.experimental.pallas import tpu as pltpu


# ---------------------------------------------------------------------------
# Per-generation configuration helpers
# ---------------------------------------------------------------------------
_LANE_CAP = 2048            # elements; tiles stay HBM-contiguous regardless
_MIN_DMA_CHUNK_BYTES = 512  # below this, strided HBM DMA bursts get slow


def _device_kind():
    try:
        return jax.devices()[0].device_kind.lower()
    except Exception:
        return ""


def _vmem_budget_and_limit(kind):
    """(working-set budget, vmem_limit_bytes) per TPU generation."""
    if "v7" in kind:
        # v7x: 64 MiB physical per TC, 32 MiB scoped default -> conservative.
        return 20 * 1024 * 1024, 30 * 1024 * 1024
    if "v6" in kind:
        # v6e: 128 MiB physical, 32 MiB scoped default -> raise explicitly.
        return 26 * 1024 * 1024, 34 * 1024 * 1024
    # v5e (16 MiB scoped default) and anything unknown: conservative.
    return 12 * 1024 * 1024, 16 * 1024 * 1024


def _sublane_pack(itemsize):
    # Packed sub-32-bit rows travel in pairs/quads along sublanes.
    return {4: 8, 2: 16, 1: 32}.get(int(itemsize), 8)


def _acc_dtype(dtype, kind):
    if not jnp.issubdtype(dtype, jnp.floating):
        return dtype
    if jnp.dtype(dtype).itemsize >= 4:
        return dtype
    # bf16 on v6e/v7x: native VALU support -> accumulate natively (keeps the
    # kernel cleanly HBM-bound and bit-matches PyTorch's native-dtype adds).
    if dtype == jnp.bfloat16 and ("v6" in kind or "v7" in kind):
        return jnp.bfloat16
    return jnp.float32


def _pick_lane_rows(shape, total):
    """Choose a lane-dense (rows, lane) factorisation of `total` elements."""
    if total % 128 == 0:
        m = total // 128
        best_any = 1
        best_with_rows = None
        k = 1
        while 128 * k <= _LANE_CAP and k <= m:
            if m % k == 0:
                best_any = k
                if (m // k) >= 8:      # keep enough rows for sublane tiling
                    best_with_rows = k
            k += 1
        k = best_with_rows if best_with_rows is not None else best_any
        lane = 128 * k
        return total // lane, lane
    # No multiple of 128 divides the element count: keep the last dim as wide
    # as possible so masked stores touch only the trailing vreg of each row.
    if len(shape) >= 2:
        rows = int(shape[0])
        return rows, total // rows
    return 1, total


# ---------------------------------------------------------------------------
# 'add' policy
# ---------------------------------------------------------------------------
def _add_kernel(*refs, acc_dtype):
    # refs = (in_ref_0, ..., in_ref_{n-1}, out_ref); each a (tile_rows, lane)
    # lane-dense VMEM tile.
    in_refs = refs[:-1]
    out_ref = refs[-1]
    acc = in_refs[0][...].astype(acc_dtype)
    for r in in_refs[1:]:
        acc = acc + r[...].astype(acc_dtype)
    out_ref[...] = acc.astype(out_ref.dtype)


def merge_add(xs):
    xs = tuple(xs)
    if len(xs) == 1:
        return xs[0]

    shape = xs[0].shape
    dtype = xs[0].dtype
    for x in xs:
        assert x.shape == shape and x.dtype == dtype, \
            "'add' requires identical shapes/dtypes"

    total = 1
    for d in shape:
        total *= int(d)

    kind = _device_kind()
    itemsize = int(jnp.dtype(dtype).itemsize)
    pack = _sublane_pack(itemsize)

    rows, lane = _pick_lane_rows(shape, total)
    xs2d = tuple(x.reshape(rows, lane) for x in xs)

    # Tile rows so the 2*(n_inputs+1) double-buffered tiles fit the
    # per-generation scoped-VMEM budget.
    budget, vmem_limit = _vmem_budget_and_limit(kind)
    n_bufs = 2 * (len(xs) + 1)
    max_tile_rows = max(1, budget // (n_bufs * lane * itemsize))
    tile_rows = min(rows, max_tile_rows)

    # Give the DMA pipeline (and v7x's two TensorCores) several grid steps to
    # work with when the tensor is big enough.
    grid_target = 4
    if rows >= grid_target * pack:
        tile_rows = min(tile_rows, pl.cdiv(rows, grid_target))

    # Sublane-packing alignment; tile_rows == rows (full dim) is always legal.
    if tile_rows != rows:
        if tile_rows >= pack:
            tile_rows = (tile_rows // pack) * pack
        else:
            tile_rows = min(rows, pack)

    grid = (pl.cdiv(rows, tile_rows),)

    acc_dtype = _acc_dtype(dtype, kind)
    cost = pl.CostEstimate(
        flops=int((len(xs) - 1) * total),
        transcendentals=0,
        bytes_accessed=int((len(xs) + 1) * total * itemsize),
    )
    kernel = functools.partial(_add_kernel, acc_dtype=acc_dtype)

    out2d = pl.pallas_call(
        kernel,
        out_shape=jax.ShapeDtypeStruct((rows, lane), dtype),
        grid=grid,
        in_specs=[pl.BlockSpec((tile_rows, lane), lambda i: (i, 0)) for _ in xs2d],
        out_specs=pl.BlockSpec((tile_rows, lane), lambda i: (i, 0)),
        compiler_params=pltpu.CompilerParams(
            dimension_semantics=("parallel",),
            vmem_limit_bytes=vmem_limit),
        cost_estimate=cost,
    )(*xs2d)
    return out2d.reshape(shape)


# ---------------------------------------------------------------------------
# 'cat' policy — path 1: direct HBM->HBM DMA placement (large slabs)
# ---------------------------------------------------------------------------
def _cat_dma_kernel(*args, num_inputs, offsets, widths):
    in_refs = args[:num_inputs]          # HBM refs, shape (N, K_i)
    out_ref = args[num_inputs]           # HBM ref,  shape (N, K_total)
    sem = args[num_inputs + 1]           # one DMA semaphore per input

    copies = []
    for i in range(num_inputs):
        cp = pltpu.make_async_copy(
            in_refs[i],
            out_ref.at[:, pl.ds(offsets[i], widths[i])],
            sem.at[i],
        )
        cp.start()
        copies.append(cp)
    for cp in copies:
        cp.wait()


def _cat_hbm_dma(xs2d, n, k_total, offsets, widths, dtype, itemsize):
    cost = pl.CostEstimate(
        flops=0, transcendentals=0,
        bytes_accessed=int(2 * n * k_total * itemsize))
    kernel = functools.partial(
        _cat_dma_kernel, num_inputs=len(xs2d), offsets=offsets, widths=widths)
    return pl.pallas_call(
        kernel,
        out_shape=jax.ShapeDtypeStruct((n, k_total), dtype),
        in_specs=[pl.BlockSpec(memory_space=pl.ANY) for _ in xs2d],
        out_specs=pl.BlockSpec(memory_space=pl.ANY),
        scratch_shapes=[pltpu.SemaphoreType.DMA((len(xs2d),))],
        cost_estimate=cost,
    )(*xs2d)


# ---------------------------------------------------------------------------
# 'cat' policy — path 2: VMEM-staged (skinny per-row slabs, < 512 B)
# ---------------------------------------------------------------------------
def _cat_vmem_kernel(*args, num_inputs, offsets, widths):
    # Input blocks and the output block are VMEM-resident (auto-pipelined big
    # contiguous HBM DMAs); the per-row channel scatter happens as cheap local
    # VMEM->VMEM DMAs, so HBM only ever sees full-width contiguous traffic.
    in_refs = args[:num_inputs]
    out_ref = args[num_inputs]
    sem = args[num_inputs + 1]

    copies = []
    for i in range(num_inputs):
        cp = pltpu.make_async_copy(
            in_refs[i],
            out_ref.at[:, pl.ds(offsets[i], widths[i])],
            sem.at[i],
        )
        cp.start()
        copies.append(cp)
    for cp in copies:
        cp.wait()


def _cat_vmem_staged(xs2d, n, k_total, offsets, widths, dtype, itemsize):
    kind = _device_kind()
    budget, vmem_limit = _vmem_budget_and_limit(kind)
    pack = _sublane_pack(itemsize)

    # ~2x (inputs + output) double-buffered bytes per batch row.
    bytes_per_row = 4 * k_total * itemsize
    max_tile_n = max(1, budget // bytes_per_row)
    tile_n = min(n, max_tile_n)
    if tile_n != n:
        if tile_n >= pack:
            tile_n = (tile_n // pack) * pack
        else:
            tile_n = min(n, pack)
    grid = (pl.cdiv(n, tile_n),)

    cost = pl.CostEstimate(
        flops=0, transcendentals=0,
        bytes_accessed=int(2 * n * k_total * itemsize))
    kernel = functools.partial(
        _cat_vmem_kernel, num_inputs=len(xs2d), offsets=offsets, widths=widths)

    return pl.pallas_call(
        kernel,
        out_shape=jax.ShapeDtypeStruct((n, k_total), dtype),
        grid=grid,
        in_specs=[pl.BlockSpec((tile_n, wk), lambda i: (i, 0)) for wk in widths],
        out_specs=pl.BlockSpec((tile_n, k_total), lambda i: (i, 0)),
        scratch_shapes=[pltpu.SemaphoreType.DMA((len(xs2d),))],
        compiler_params=pltpu.CompilerParams(
            dimension_semantics=("parallel",),
            vmem_limit_bytes=vmem_limit),
        cost_estimate=cost,
    )(*xs2d)


def merge_cat(xs):
    xs = tuple(xs)
    if len(xs) == 1:
        return xs[0]

    n, _, h, w = xs[0].shape
    dtype = xs[0].dtype
    for x in xs:
        assert x.ndim == 4 and x.shape[0] == n and x.shape[2] == h and x.shape[3] == w
        assert x.dtype == dtype, "'cat' requires identical dtypes"

    channels = tuple(int(x.shape[1]) for x in xs)
    widths = tuple(c * h * w for c in channels)     # contiguous slab per input
    offsets = []
    off = 0
    for k in widths:
        offsets.append(off)
        off += k
    offsets = tuple(offsets)
    k_total = off
    c_total = sum(channels)

    itemsize = int(jnp.dtype(dtype).itemsize)
    # Channel concat == placement of contiguous lane slabs at static offsets
    # in the flattened (N, K_total) output.
    xs2d = tuple(x.reshape(n, k) for x, k in zip(xs, widths))

    if min(widths) * itemsize >= _MIN_DMA_CHUNK_BYTES:
        out2d = _cat_hbm_dma(xs2d, n, k_total, offsets, widths, dtype, itemsize)
    else:
        out2d = _cat_vmem_staged(xs2d, n, k_total, offsets, widths, dtype, itemsize)
    return out2d.reshape(n, c_total, h, w)


# ---------------------------------------------------------------------------
# Module-equivalent wrapper
# ---------------------------------------------------------------------------
def merge_block(xs, policy):
    if policy == 'add':
        return merge_add(xs)
    elif policy == 'cat':
        return merge_cat(xs)
    else:
        raise ValueError(
            "`merge_policy` must be one of: ['add', 'cat'], got {}".format(policy))


if __name__ == "__main__":
    key = jax.random.PRNGKey(0)
    k1, k2, k3, k4 = jax.random.split(key, 4)

    # Small NCHW feature-pyramid-style merge.
    N, C, H, W = 2, 4, 16, 16
    x0 = jax.random.normal(k1, (N, C, H, W), dtype=jnp.float32)
    x1 = jax.random.normal(k2, (N, C, H, W), dtype=jnp.float32)
    x2 = jax.random.normal(k3, (N, C, H, W), dtype=jnp.float32)
    xs = [x0, x1, x2]

    # policy = 'add'
    out_add = jax.block_until_ready(merge_block(xs, 'add'))
    ref_add = x0 + x1 + x2
    assert out_add.shape == (N, C, H, W)
    assert jnp.allclose(out_add, ref_add, atol=1e-5), "add mismatch"

    # policy = 'add' with element count not a multiple of 128 (wide-row fallback)
    y0 = jax.random.normal(k1, (2, 3, 7, 7), dtype=jnp.float32)
    y1 = jax.random.normal(k2, (2, 3, 7, 7), dtype=jnp.float32)
    out_add2 = jax.block_until_ready(merge_block([y0, y1], 'add'))
    assert jnp.allclose(out_add2, y0 + y1, atol=1e-5), "fallback add mismatch"

    # policy = 'cat' (equal channels, wide slabs -> HBM DMA path)
    out_cat = jax.block_until_ready(merge_block(xs, 'cat'))
    ref_cat = jnp.concatenate(xs, axis=1)
    assert out_cat.shape == (N, 3 * C, H, W)
    assert jnp.allclose(out_cat, ref_cat, atol=1e-6), "cat mismatch"

    # policy = 'cat' with heterogeneous channel counts
    x3 = jax.random.normal(k4, (N, 6, H, W), dtype=jnp.float32)
    out_cat2 = jax.block_until_ready(merge_block([x0, x3], 'cat'))
    ref_cat2 = jnp.concatenate([x0, x3], axis=1)
    assert out_cat2.shape == (N, C + 6, H, W)
    assert jnp.allclose(out_cat2, ref_cat2, atol=1e-6), "hetero cat mismatch"

    # policy = 'cat' with skinny per-row slabs (< 512 B) -> VMEM-staged path
    z0 = jax.random.normal(k1, (2, 2, 7, 7), dtype=jnp.float32)
    z1 = jax.random.normal(k2, (2, 3, 7, 7), dtype=jnp.float32)
    out_cat3 = jax.block_until_ready(merge_block([z0, z1], 'cat'))
    ref_cat3 = jnp.concatenate([z0, z1], axis=1)
    assert out_cat3.shape == (2, 5, 7, 7)
    assert jnp.allclose(out_cat3, ref_cat3, atol=1e-6), "skinny cat mismatch"

    print("KERNEL_OK")
</pallas_src>

<mosaic_0001>
module attributes {stable_mosaic.version = 11 : i64} {
  func.func @_add_kernel(%arg0: i32, %arg1: memref<8x256xf32, #tpu.memory_space<vmem>>, %arg2: memref<8x256xf32, #tpu.memory_space<vmem>>, %arg3: memref<8x256xf32, #tpu.memory_space<vmem>>, %arg4: memref<8x256xf32, #tpu.memory_space<vmem>>) attributes {dimension_semantics = [#tpu.dimension_semantics<parallel>], iteration_bounds = array<i64: 1>, scalar_prefetch = 0 : i64, scratch_operands = 0 : i64, tpu.core_type = #tpu.core_type<tc>, window_params = [{transform_indices = @transform_0, window_bounds = array<i64: 8, 256>}, {transform_indices = @transform_1, window_bounds = array<i64: 8, 256>}, {transform_indices = @transform_2, window_bounds = array<i64: 8, 256>}, {transform_indices = @transform_3, window_bounds = array<i64: 8, 256>}]} {
    %c0 = arith.constant 0 : index
    %c0_0 = arith.constant 0 : index
    %0 = vector.load %arg1[%c0, %c0_0] : memref<8x256xf32, #tpu.memory_space<vmem>>, vector<8x256xf32>
    %c0_1 = arith.constant 0 : index
    %c0_2 = arith.constant 0 : index
    %1 = vector.load %arg2[%c0_1, %c0_2] : memref<8x256xf32, #tpu.memory_space<vmem>>, vector<8x256xf32>
    %2 = arith.addf %0, %1 : vector<8x256xf32>
    %c0_3 = arith.constant 0 : index
    %c0_4 = arith.constant 0 : index
    %3 = vector.load %arg3[%c0_3, %c0_4] : memref<8x256xf32, #tpu.memory_space<vmem>>, vector<8x256xf32>
    %4 = arith.addf %2, %3 : vector<8x256xf32>
    %c0_5 = arith.constant 0 : index
    %c0_6 = arith.constant 0 : index
    %5 = vector.load %arg4[%c0_5, %c0_6] : memref<8x256xf32, #tpu.memory_space<vmem>>, vector<8x256xf32>
    tpu.vector_store %arg4[%c0_5, %c0_6], %4 {strides = array<i32>} : memref<8x256xf32, #tpu.memory_space<vmem>>, vector<8x256xf32>,
    return
  }
  func.func @transform_0(%arg0: i32) -> (i32, i32) {
    %c0_i32 = arith.constant 0 : i32
    %c0_i32_0 = arith.constant 0 : i32
    return %arg0, %c0_i32 : i32, i32
  }
  func.func @transform_1(%arg0: i32) -> (i32, i32) {
    %c0_i32 = arith.constant 0 : i32
    %c0_i32_0 = arith.constant 0 : i32
    return %arg0, %c0_i32 : i32, i32
  }
  func.func @transform_2(%arg0: i32) -> (i32, i32) {
    %c0_i32 = arith.constant 0 : i32
    %c0_i32_0 = arith.constant 0 : i32
    return %arg0, %c0_i32 : i32, i32
  }
  func.func @transform_3(%arg0: i32) -> (i32, i32) {
    %c0_i32 = arith.constant 0 : i32
    %c0_i32_0 = arith.constant 0 : i32
    return %arg0, %c0_i32 : i32, i32
  }
}

</mosaic_0001>

<llo_original>
// kernel: tpu_custom_call.1
$region0: #{tpu_custom_call.1}
  #allocation0 [shape = 'u32[]', space=smem, size = 0x4, offset = 0x4, fixed_abs, tag = 'smem constant byte address 0x4 - core index']
  #allocation1 [shape = 'u32[144,128]{1,0:T(1,128)}', space=vmem, size = 0x12000, scoped, tag = 'internal scratch']
  %s0 = inlined_call_operand.hbm [shape: f32[8,256], index: 0, kind: input, shape index: {}]
  %s1 = inlined_call_operand.hbm [shape: f32[8,256], index: 1, kind: input, shape index: {}]
  %s2 = inlined_call_operand.hbm [shape: f32[8,256], index: 2, kind: input, shape index: {}]
  %s3 = inlined_call_operand.hbm [shape: f32[8,256], index: 3, kind: output, shape index: {}]
  %s4 = sld [smem:[#allocation0]]
  $region34: #{tpu_custom_call.1} parent=0
    _
  %s6 = ssub.s32 1, %s4
  %s7 = scalar_select 0, %s6, %s4
  $region1: #{tpu_custom_call.1} parent=0
    #allocation2 [shape = 'u8[8192]{0}', space=vmem, size = 0x2000, scoped, tag = 'input window, operand 0, single buffered']
    #allocation3 [shape = 's32[1]{0}', space=sflag, size = 0x4, scoped, tag = 'scoped memory for tpu_custom_call.1']
    #allocation4 [shape = 's32[1]{0}', space=sflag, size = 0x4, scoped, tag = 'scoped memory for tpu_custom_call.1']
    #allocation5 [shape = 'u8[8192]{0}', space=vmem, size = 0x2000, scoped, tag = 'input window, operand 1, single buffered']
    #allocation6 [shape = 's32[1]{0}', space=sflag, size = 0x4, scoped, tag = 'scoped memory for tpu_custom_call.1']
    #allocation7 [shape = 'u8[8192]{0}', space=vmem, size = 0x2000, scoped, tag = 'input window, operand 2, single buffered']
    #allocation8 [shape = 'u8[8192]{0}', space=vmem, size = 0x2000, scoped, tag = 'output window, operand 0, single buffered']
    %8 = vsyncpa [#allocation3], 0
    %9 = vsyncpa [#allocation6], 0
    %10 = vsyncpa [#allocation4], 0
    // Predicated region
    $region2: #{tpu_custom_call.1} parent=1 // pred_check
      _
    $region3: #{tpu_custom_call.1} parent=1 // pred_check_branch
      %12 = sbr.rel (0) target = $region5
    $region4: #{tpu_custom_call.1} parent=1 // pred_region
      %s14 = ssub.s32 256, 256
      %15 = vsyncadd [#allocation3], %s14
      %s17 = sshll.u32 [#allocation2], 4
      %s18 = int_to_ptr.vmem [resolvable:$true] %s17
      %20 = dma.hbm_to_vmem [thread:$0]  %s0, 256, %s18, [#allocation3]
    $region5: #{tpu_custom_call.1} parent=1 // pred_fallthru
      _
    // Predicated region
    $region6: #{tpu_custom_call.1} parent=1 // pred_check
      _
    $region7: #{tpu_custom_call.1} parent=1 // pred_check_branch
      %22 = sbr.rel (0) target = $region9
    $region8: #{tpu_custom_call.1} parent=1 // pred_region
      %s24 = ssub.s32 256, 256
      %25 = vsyncadd [#allocation6], %s24
      %s27 = sshll.u32 [#allocation5], 4
      %s28 = int_to_ptr.vmem [resolvable:$true] %s27
      %30 = dma.hbm_to_vmem [thread:$0]  %s1, 256, %s28, [#allocation6]
    $region9: #{tpu_custom_call.1} parent=1 // pred_fallthru
      _
    // Predicated region
    $region10: #{tpu_custom_call.1} parent=1 // pred_check
      _
    $region11: #{tpu_custom_call.1} parent=1 // pred_check_branch
      %32 = sbr.rel (0) target = $region13
    $region12: #{tpu_custom_call.1} parent=1 // pred_region
      %s34 = ssub.s32 256, 256
      %35 = vsyncadd [#allocation6], %s34
      %s37 = sshll.u32 [#allocation7], 4
      %s38 = int_to_ptr.vmem [resolvable:$true] %s37
      %40 = dma.hbm_to_vmem [thread:$0]  %s2, 256, %s38, [#allocation6]
    $region13: #{tpu_custom_call.1} parent=1 // pred_fallthru
      _
    // Predicated region
    $region14: #{tpu_custom_call.1} parent=1 // pred_check
      _
    $region15: #{tpu_custom_call.1} parent=1 // pred_check_branch
      %42 = sbr.rel (0) target = $region17
    $region16: #{tpu_custom_call.1} parent=1 // pred_region
      %43 = dma.done [#allocation3], 256
    $region17: #{tpu_custom_call.1} parent=1 // pred_fallthru
      _
    // Predicated region
    $region18: #{tpu_custom_call.1} parent=1 // pred_check
      _
    $region19: #{tpu_custom_call.1} parent=1 // pred_check_branch
      %45 = sbr.rel (0) target = $region21
    $region20: #{tpu_custom_call.1} parent=1 // pred_region
      %46 = dma.done [#allocation6], 256
    $region21: #{tpu_custom_call.1} parent=1 // pred_fallthru
      _
    // Predicated region
    $region22: #{tpu_custom_call.1} parent=1 // pred_check
      _
    $region23: #{tpu_custom_call.1} parent=1 // pred_check_branch
      %48 = sbr.rel (0) target = $region25
    $region24: #{tpu_custom_call.1} parent=1 // pred_region
      %49 = dma.done [#allocation6], 256
    $region25: #{tpu_custom_call.1} parent=1 // pred_fallthru
      _
    %v50 = vld [vmem:[#allocation2] sm:$0xff]
    %v51 = vld [vmem:[#allocation2 + $0x8] sm:$0xff]
    %v52 = vld [vmem:[#allocation5] sm:$0xff]
    %v53 = vld [vmem:[#allocation5 + $0x8] sm:$0xff]
    %v54 = vadd.f32 %v50, %v52
    %v55 = vadd.f32 %v51, %v53
    %v56 = vld [vmem:[#allocation7] sm:$0xff]
    %v57 = vld [vmem:[#allocation7 + $0x8] sm:$0xff]
    %v58 = vadd.f32 %v54, %v56
    %v59 = vadd.f32 %v55, %v57
    %60 = vst [vmem:[#allocation8] sm:$0xff] %v58
    %61 = vst [vmem:[#allocation8 + $0x8] sm:$0xff] %v59
    // Predicated region
    $region26: #{tpu_custom_call.1} parent=1 // pred_check
      _
    $region27: #{tpu_custom_call.1} parent=1 // pred_check_branch
      %63 = sbr.rel (0) target = $region29
    $region28: #{tpu_custom_call.1} parent=1 // pred_region
      %s65 = ssub.s32 256, 256
      %66 = vsyncadd [#allocation4], %s65
      %s68 = sshll.u32 [#allocation8], 4
      %s69 = int_to_ptr.vmem [resolvable:$true] %s68
      %71 = dma.vmem_to_hbm [thread:$0]  %s69, 256, %s3, [#allocation4]
    $region29: #{tpu_custom_call.1} parent=1 // pred_fallthru
      _
    // Predicated region
    $region30: #{tpu_custom_call.1} parent=1 // pred_check
      _
    $region31: #{tpu_custom_call.1} parent=1 // pred_check_branch
      %73 = sbr.rel (0) target = $region33
    $region32: #{tpu_custom_call.1} parent=1 // pred_region
      %74 = dma.done [#allocation4], 256
    $region33: #{tpu_custom_call.1} parent=1 // pred_fallthru
      _
    %75 = vsyncpa [#allocation3], 1
    %76 = vsyncpa [#allocation6], 1
    %77 = vsyncpa [#allocation4], 1

</llo_original>
